<compile_context>
chip_gen: v7x
topology: tpu7x:2x2x1
jax: 0.10.0
libtpu: 0.0.40
codegen_flags: <defaults>
</compile_context>

<pallas_src>
import math

import jax
import jax.numpy as jnp
from jax.experimental import pallas as pl
from jax.experimental.pallas import tpu as pltpu

_LANE_CAP = 8192  # max lane width we will give a single block


def _dyt_kernel(alpha_ref, w_ref, b_ref, x_ref, o_ref):
    # alpha_ref: (1, 1) f32 scalar in SMEM.
    # w_ref/b_ref: (tile_rows, 1) per-row or (1, lanes) per-lane, already in x.dtype;
    #              both broadcast against the (tile_rows, lanes) x block.
    x = x_ref[...].astype(jnp.float32)          # f32 tanh argument (precision + EUP path)
    t = jnp.tanh(alpha_ref[0, 0] * x)
    o_ref[...] = (t * w_ref[...] + b_ref[...]).astype(o_ref.dtype)


def _scoped_vmem_limit_bytes():
    """Scoped VMEM limit: ~3/4 of physical, capped at 64 MiB (48 MiB on v7x)."""
    cap = 64 * 1024 * 1024
    try:
        info = pltpu.get_tpu_info()
        cap = int(getattr(info, "vmem_capacity_bytes", cap)) or cap
    except Exception:
        pass
    return int(min(max(cap * 3 // 4, 32 * 1024 * 1024), 64 * 1024 * 1024))


def _dyt_call(x2d, alpha, w2d, b2d, *, per_row):
    """Run the elementwise kernel over a lane-dense 2D slab [rows, lanes]."""
    rows, lanes = x2d.shape
    x_item = jnp.dtype(x2d.dtype).itemsize
    wb_item = jnp.dtype(w2d.dtype).itemsize

    # Sublane packing factor for the dtype: 8 rows/vreg (f32), 16 (bf16), 32 (int8/fp8).
    pack = 8 * max(1, 4 // x_item)

    limit = _scoped_vmem_limit_bytes()
    usable = limit * 3 // 4  # headroom for Mosaic internal scratch

    # VMEM accounting per tile row: x + out blocks are double-buffered; per-row
    # (tile_rows, 1) weight/bias blocks are lane-padded to 128 in VMEM and also
    # double-buffered (2 arrays).  Per-lane (1, lanes) w/b blocks are a fixed cost.
    per_tile_row = 4 * lanes * x_item + (4 * 128 * wb_item if per_row else 0)
    fixed = 0 if per_row else 4 * lanes * wb_item
    rows_by_vmem = max(pack, (usable - fixed) // per_tile_row)

    # Target ~6 MiB per x block (v7x sweet spot; above the v5e/v6e roofline knee).
    rows_by_target = max(pack, (6 * 1024 * 1024) // max(1, lanes * x_item))

    cand = min(rows_by_vmem, rows_by_target)
    cand = max(pack, (cand // pack) * pack)
    tile_rows = min(rows, cand)
    grid = (pl.cdiv(rows, tile_rows),)

    alpha2d = jnp.asarray(alpha, dtype=jnp.float32).reshape(-1)[0].reshape(1, 1)

    if per_row:
        # (rows, 1) per-channel scale/shift; block follows the row tiling.
        wb_spec = pl.BlockSpec((tile_rows, 1), lambda i: (i, 0))
    else:
        # (1, lanes) per-lane scale/shift; same (small) block every grid step.
        wb_spec = pl.BlockSpec((1, lanes), lambda i: (0, 0))

    return pl.pallas_call(
        _dyt_kernel,
        out_shape=jax.ShapeDtypeStruct((rows, lanes), x2d.dtype),
        grid=grid,
        in_specs=[
            pl.BlockSpec(memory_space=pltpu.MemorySpace.SMEM),   # alpha (1,1)
            wb_spec,                                             # weight
            wb_spec,                                             # bias
            pl.BlockSpec((tile_rows, lanes), lambda i: (i, 0)),  # x
        ],
        out_specs=pl.BlockSpec((tile_rows, lanes), lambda i: (i, 0)),
        compiler_params=pltpu.CompilerParams(
            dimension_semantics=("parallel",),
            vmem_limit_bytes=limit,
        ),
    )(alpha2d, w2d, b2d, x2d)


def _choose_lanes_channels_last(total, c):
    """Lane width for the channels_last path.

    Must be a multiple of c (so a (1, lanes) weight/bias row broadcasts correctly),
    should be a multiple of 128 (lane-dense stores) and divide `total`.
    Returns (lanes, needs_pad).
    """
    lcm = c * 128 // math.gcd(c, 128)
    if lcm <= _LANE_CAP:
        for k in range(_LANE_CAP // lcm, 0, -1):          # multiples of lcm(c,128)
            if total % (k * lcm) == 0:
                return k * lcm, False
    for g in range(max(1, _LANE_CAP // c), 0, -1):        # any multiple of c
        lanes = g * c
        if total % lanes == 0:
            if lanes >= 128:
                return lanes, False
            break
    # Ragged/tiny case: pad the flat array up to a multiple of lcm(c, 128).
    # Costs one extra XLA pad/slice copy, but keeps every store lane-dense.
    return lcm, True


def dynamic_tanh(x, alpha, weight, bias, channels_last):
    """Forward pass of DynamicTanh.

    channels_last=True : x is [..., *normalized_shape]; weight/bias broadcast on the
                         trailing dims (flattened internally).
    channels_last=False: x is [N, C, H, W]; weight/bias shape [C].
    """
    weight = jnp.ravel(weight)
    bias = jnp.ravel(bias)
    c = weight.shape[0]

    if channels_last:
        orig_shape = x.shape
        total = x.size
        lanes, needs_pad = _choose_lanes_channels_last(total, c)
        flat = x.reshape(-1)
        if needs_pad:
            flat = jnp.pad(flat, (0, (-total) % lanes))
        rows = flat.size // lanes
        x2d = flat.reshape(rows, lanes)
        reps = lanes // c
        w2d = jnp.tile(weight, reps).reshape(1, lanes).astype(x.dtype)
        b2d = jnp.tile(bias, reps).reshape(1, lanes).astype(x.dtype)
        y2d = _dyt_call(x2d, alpha, w2d, b2d, per_row=False)
        if needs_pad:
            return y2d.reshape(-1)[:total].reshape(orig_shape)
        return y2d.reshape(orig_shape)

    # channels_first (NCHW)
    n, cc, h, w = x.shape
    assert cc == c, "weight/bias length must equal the channel dim for NCHW"
    hw = h * w

    # Case A: a divisor of H*W that is a multiple of 128 -> fully lane-dense,
    # per-row weight/bias, no padding, no copies.
    lanes = 0
    for k in range(min(_LANE_CAP, hw) // 128, 0, -1):
        if hw % (k * 128) == 0:
            lanes = k * 128
            break

    if lanes:
        sub = hw // lanes
        rows = n * c * sub
        x2d = x.reshape(rows, lanes)
        w2d = jnp.tile(jnp.repeat(weight, sub), n).reshape(rows, 1).astype(x.dtype)
        b2d = jnp.tile(jnp.repeat(bias, sub), n).reshape(rows, 1).astype(x.dtype)
        y2d = _dyt_call(x2d, alpha, w2d, b2d, per_row=True)
        return y2d.reshape(n, c, h, w)

    if hw >= 128:
        # Case B: H*W not 128-aligned but wide (e.g. 196, 784, 3136): use the whole
        # spatial plane as the lane axis (>=50% lane utilization, avoids any copy).
        rows = n * c
        x2d = x.reshape(rows, hw)
        w2d = jnp.tile(weight, n).reshape(rows, 1).astype(x.dtype)
        b2d = jnp.tile(bias, n).reshape(rows, 1).astype(x.dtype)
        y2d = _dyt_call(x2d, alpha, w2d, b2d, per_row=True)
        return y2d.reshape(n, c, h, w)

    # Case C: tiny spatial extent (H*W < 128, e.g. 7x7): pack one full C*H*W period
    # per row and use per-lane weight/bias so stores stay lane-dense.
    lanes = c * hw
    x2d = x.reshape(n, lanes)
    w2d = jnp.repeat(weight, hw).reshape(1, lanes).astype(x.dtype)
    b2d = jnp.repeat(bias, hw).reshape(1, lanes).astype(x.dtype)
    y2d = _dyt_call(x2d, alpha, w2d, b2d, per_row=False)
    return y2d.reshape(n, c, h, w)


if __name__ == "__main__":
    key = jax.random.PRNGKey(0)

    # Module params (matching nn.Module __init__ with normalized_shape=C=4,
    # alpha_init_value=0.5); non-trivial weight/bias so channel alignment is tested.
    C = 4
    alpha = jnp.asarray([0.5], dtype=jnp.float32)            # nn.Parameter(ones(1) * 0.5)
    weight = 1.0 + 0.1 * jnp.arange(C, dtype=jnp.float32)
    bias = 0.01 * jnp.arange(C, dtype=jnp.float32)

    def ref_cf(x, a, w, b):
        return jnp.tanh(a * x) * w[:, None, None] + b[:, None, None]

    def ref_cl(x, a, w, b):
        return jnp.tanh(a * x) * w + b

    # 1) channels_first, H*W = 256 (128-aligned fast path)
    x = jax.random.normal(key, (2, C, 16, 16), dtype=jnp.float32)
    out = jax.block_until_ready(dynamic_tanh(x, alpha, weight, bias, channels_last=False))
    assert jnp.allclose(out, ref_cf(x, alpha[0], weight, bias), atol=1e-5), "NCHW aligned mismatch"

    # 2) channels_last (NHWC) of the same data
    x_cl = jnp.transpose(x, (0, 2, 3, 1))
    out_cl = jax.block_until_ready(dynamic_tanh(x_cl, alpha, weight, bias, channels_last=True))
    assert jnp.allclose(out_cl, ref_cl(x_cl, alpha[0], weight, bias), atol=1e-5), "NHWC mismatch"

    # 3) channels_first, H*W = 196 (not 128-aligned; lanes == H*W path)
    x3 = jax.random.normal(jax.random.PRNGKey(1), (2, C, 14, 14), dtype=jnp.float32)
    out3 = jax.block_until_ready(dynamic_tanh(x3, alpha, weight, bias, channels_last=False))
    assert jnp.allclose(out3, ref_cf(x3, alpha[0], weight, bias), atol=1e-5), "NCHW 14x14 mismatch"

    # 4) channels_first, H*W = 49 < 128 (per-lane C*H*W path)
    x4 = jax.random.normal(jax.random.PRNGKey(2), (2, C, 7, 7), dtype=jnp.float32)
    out4 = jax.block_until_ready(dynamic_tanh(x4, alpha, weight, bias, channels_last=False))
    assert jnp.allclose(out4, ref_cf(x4, alpha[0], weight, bias), atol=1e-5), "NCHW 7x7 mismatch"

    # 5) channels_last with a ragged flat size (odd rows_c) -> padded lane-dense path
    x5 = jax.random.normal(jax.random.PRNGKey(3), (2, 3, 3, C), dtype=jnp.float32)
    out5 = jax.block_until_ready(dynamic_tanh(x5, alpha, weight, bias, channels_last=True))
    assert jnp.allclose(out5, ref_cl(x5, alpha[0], weight, bias), atol=1e-5), "NHWC ragged mismatch"

    # 6) bf16 input: math done in f32 inside the kernel, output in bf16
    xb = x_cl.astype(jnp.bfloat16)
    outb = jax.block_until_ready(dynamic_tanh(xb, alpha, weight, bias, channels_last=True))
    refb = ref_cl(xb.astype(jnp.float32), alpha[0], weight, bias)
    assert jnp.allclose(outb.astype(jnp.float32), refb, atol=3e-2), "NHWC bf16 mismatch"

    print("KERNEL_OK")
</pallas_src>

<mosaic_0001>
module attributes {stable_mosaic.version = 11 : i64} {
  func.func @_dyt_kernel(%arg0: i32, %arg1: memref<1x1xf32, #tpu.memory_space<smem>>, %arg2: memref<8x1xf32, #tpu.memory_space<vmem>>, %arg3: memref<8x1xf32, #tpu.memory_space<vmem>>, %arg4: memref<8x256xf32, #tpu.memory_space<vmem>>, %arg5: memref<8x256xf32, #tpu.memory_space<vmem>>) attributes {dimension_semantics = [#tpu.dimension_semantics<parallel>], iteration_bounds = array<i64: 1>, scalar_prefetch = 0 : i64, scratch_operands = 0 : i64, tpu.core_type = #tpu.core_type<tc>, window_params = [{transform_indices = @transform_0, window_bounds = array<i64: 1, 1>}, {transform_indices = @transform_1, window_bounds = array<i64: 8, 1>}, {transform_indices = @transform_2, window_bounds = array<i64: 8, 1>}, {transform_indices = @transform_3, window_bounds = array<i64: 8, 256>}, {transform_indices = @transform_4, window_bounds = array<i64: 8, 256>}]} {
    %c0 = arith.constant 0 : index
    %c0_0 = arith.constant 0 : index
    %0 = vector.load %arg4[%c0, %c0_0] : memref<8x256xf32, #tpu.memory_space<vmem>>, vector<8x256xf32>
    %c0_1 = arith.constant 0 : index
    %c0_2 = arith.constant 0 : index
    %1 = memref.load %arg1[%c0_1, %c0_2] : memref<1x1xf32, #tpu.memory_space<smem>>
    %2 = vector.broadcast %1 : f32 to vector<8x256xf32>
    %3 = arith.mulf %2, %0 : vector<8x256xf32>
    %4 = math.tanh %3 : vector<8x256xf32>
    %c0_3 = arith.constant 0 : index
    %c0_4 = arith.constant 0 : index
    %5 = vector.load %arg2[%c0_3, %c0_4] : memref<8x1xf32, #tpu.memory_space<vmem>>, vector<8x1xf32>
    %6 = vector.broadcast %5 : vector<8x1xf32> to vector<8x256xf32>
    %7 = arith.mulf %4, %6 : vector<8x256xf32>
    %c0_5 = arith.constant 0 : index
    %c0_6 = arith.constant 0 : index
    %8 = vector.load %arg3[%c0_5, %c0_6] : memref<8x1xf32, #tpu.memory_space<vmem>>, vector<8x1xf32>
    %9 = vector.broadcast %8 : vector<8x1xf32> to vector<8x256xf32>
    %10 = arith.addf %7, %9 : vector<8x256xf32>
    %c0_7 = arith.constant 0 : index
    %c0_8 = arith.constant 0 : index
    %11 = vector.load %arg5[%c0_7, %c0_8] : memref<8x256xf32, #tpu.memory_space<vmem>>, vector<8x256xf32>
    tpu.vector_store %arg5[%c0_7, %c0_8], %10 {strides = array<i32>} : memref<8x256xf32, #tpu.memory_space<vmem>>, vector<8x256xf32>,
    return
  }
  func.func @transform_0(%arg0: i32) -> (i32, i32) {
    %c0_i32 = arith.constant 0 : i32
    %c0_i32_0 = arith.constant 0 : i32
    %c0_i32_1 = arith.constant 0 : i32
    return %c0_i32, %c0_i32_0 : i32, i32
  }
  func.func @transform_1(%arg0: i32) -> (i32, i32) {
    %c0_i32 = arith.constant 0 : i32
    %c0_i32_0 = arith.constant 0 : i32
    return %arg0, %c0_i32 : i32, i32
  }
  func.func @transform_2(%arg0: i32) -> (i32, i32) {
    %c0_i32 = arith.constant 0 : i32
    %c0_i32_0 = arith.constant 0 : i32
    return %arg0, %c0_i32 : i32, i32
  }
  func.func @transform_3(%arg0: i32) -> (i32, i32) {
    %c0_i32 = arith.constant 0 : i32
    %c0_i32_0 = arith.constant 0 : i32
    return %arg0, %c0_i32 : i32, i32
  }
  func.func @transform_4(%arg0: i32) -> (i32, i32) {
    %c0_i32 = arith.constant 0 : i32
    %c0_i32_0 = arith.constant 0 : i32
    return %arg0, %c0_i32 : i32, i32
  }
}

</mosaic_0001>

<llo_original>
// kernel: tpu_custom_call.1
$region0: #{tpu_custom_call.1}
  #allocation0 [shape = 'u32[]', space=smem, size = 0x4, offset = 0x4, fixed_abs, tag = 'smem constant byte address 0x4 - core index']
  #allocation1 [shape = 'u32[144,128]{1,0:T(1,128)}', space=vmem, size = 0x12000, scoped, tag = 'internal scratch']
  #allocation2 [shape = 'f32[1,1]{1,0:T(1,128)S(6)}', space=smem, size = 0x200, scoped, tag = 'scoped memory for tpu_custom_call.1']
  %s0 = inlined_call_operand.<no memory space> [shape: f32[1,1], index: 0, kind: input, shape index: {}]
  %s1 = inlined_call_operand.vmem [shape: f32[8,1], index: 1, kind: input, shape index: {}]
  %s2 = inlined_call_operand.vmem [shape: f32[8,1], index: 2, kind: input, shape index: {}]
  %s3 = inlined_call_operand.vmem [shape: f32[8,256], index: 3, kind: input, shape index: {}]
  %s4 = inlined_call_operand.hbm [shape: f32[8,256], index: 4, kind: output, shape index: {}]
  %s5 = sld [smem:[#allocation0]]
  $region26: #{tpu_custom_call.1} parent=0
    _
  %s7 = ssub.s32 1, %s5
  %s8 = scalar_select 0, %s7, %s5
  %9 = sst [smem:[#allocation2]] %s0
  $region1: #{tpu_custom_call.1} parent=0
    #allocation3 [shape = 'u8[8192]{0}', space=vmem, size = 0x2000, scoped, tag = 'output window, operand 0, single buffered']
    #allocation4 [shape = 's32[1]{0}', space=sflag, size = 0x4, scoped, tag = 'scoped memory for tpu_custom_call.1']
    %10 = vsyncpa [#allocation4], 0
    // Predicated region
    $region2: #{tpu_custom_call.1} parent=1 // pred_check
      _
    $region3: #{tpu_custom_call.1} parent=1 // pred_check_branch
      %12 = sbr.rel (0) target = $region5
    $region4: #{tpu_custom_call.1} parent=1 // pred_region
      _
    $region5: #{tpu_custom_call.1} parent=1 // pred_fallthru
      _
    // Predicated region
    $region6: #{tpu_custom_call.1} parent=1 // pred_check
      _
    $region7: #{tpu_custom_call.1} parent=1 // pred_check_branch
      %14 = sbr.rel (0) target = $region9
    $region8: #{tpu_custom_call.1} parent=1 // pred_region
      _
    $region9: #{tpu_custom_call.1} parent=1 // pred_fallthru
      _
    // Predicated region
    $region10: #{tpu_custom_call.1} parent=1 // pred_check
      _
    $region11: #{tpu_custom_call.1} parent=1 // pred_check_branch
      %16 = sbr.rel (0) target = $region13
    $region12: #{tpu_custom_call.1} parent=1 // pred_region
      _
    $region13: #{tpu_custom_call.1} parent=1 // pred_fallthru
      _
    // Predicated region
    $region14: #{tpu_custom_call.1} parent=1 // pred_check
      _
    $region15: #{tpu_custom_call.1} parent=1 // pred_check_branch
      %18 = sbr.rel (0) target = $region17
    $region16: #{tpu_custom_call.1} parent=1 // pred_region
      _
    $region17: #{tpu_custom_call.1} parent=1 // pred_fallthru
      _
    %v19 = vld [vmem:[%s3] sm:$0xff]
    %v20 = vld [vmem:[%s3 + $0x8] sm:$0xff]
    %s21 = sld [smem:[#allocation2]]
    %v22 = vstv %s21
    %v23 = vmul.f32 %v22, %v19
    %v24 = vmul.f32 %v22, %v20
    %v25 = vtanh.pop %v23
    %v26 = vtanh.pop %v24
    %v27 = vld [vmem:[%s1] sm:$0xff]
    %29 = vset.pattern.permute.xlu0 0
    %30 = vperm.xlu0 %29, %v27
    %v31 = vpop.permute.xlu0 %30
    %v33 = vmul.f32 %v25, %v31
    %v34 = vmul.f32 %v26, %v31
    %v35 = vld [vmem:[%s2] sm:$0xff]
    %37 = vset.pattern.permute.xlu0 0
    %38 = vperm.xlu0 %37, %v35
    %v39 = vpop.permute.xlu0 %38
    %v41 = vadd.f32 %v33, %v39
    %v42 = vadd.f32 %v34, %v39
    %43 = vst [vmem:[#allocation3] sm:$0xff] %v41
    %44 = vst [vmem:[#allocation3 + $0x8] sm:$0xff] %v42
    // Predicated region
    $region18: #{tpu_custom_call.1} parent=1 // pred_check
      _
    $region19: #{tpu_custom_call.1} parent=1 // pred_check_branch
      %46 = sbr.rel (0) target = $region21
    $region20: #{tpu_custom_call.1} parent=1 // pred_region
      %s48 = ssub.s32 256, 256
      %49 = vsyncadd [#allocation4], %s48
      %s51 = sshll.u32 [#allocation3], 4
      %s52 = int_to_ptr.vmem [resolvable:$true] %s51
      %54 = dma.vmem_to_hbm [thread:$0]  %s52, 256, %s4, [#allocation4]
    $region21: #{tpu_custom_call.1} parent=1 // pred_fallthru
      _
    // Predicated region
    $region22: #{tpu_custom_call.1} parent=1 // pred_check
      _
    $region23: #{tpu_custom_call.1} parent=1 // pred_check_branch
      %56 = sbr.rel (0) target = $region25
    $region24: #{tpu_custom_call.1} parent=1 // pred_region
      %57 = dma.done [#allocation4], 256
    $region25: #{tpu_custom_call.1} parent=1 // pred_fallthru
      _
    %58 = vsyncpa [#allocation4], 1

</llo_original>
